<compile_context>
chip_gen: v7x
topology: tpu7x:2x2x1
jax: 0.10.0
libtpu: 0.0.40
codegen_flags: <defaults>
</compile_context>

<pallas_src>
import jax
import jax.numpy as jnp
from jax.experimental import pallas as pl
from jax.experimental.pallas import tpu as pltpu

_LANES = 128
_SUBLANES = 8


def _cdiv(a, b):
    return -(-a // b)


def _round_up(a, b):
    return _cdiv(a, b) * b


def _tpu_info():
    """(per-core VMEM bytes, tensorcores per chip) with conservative fallbacks."""
    vmem_cap = 128 * 1024 * 1024
    num_tc = 1
    kind = ""
    try:
        kind = jax.devices()[0].device_kind.lower()
    except Exception:
        pass
    try:
        vmem_cap = int(getattr(pltpu.get_tpu_info(), "vmem_capacity_bytes", vmem_cap))
    except Exception:
        pass
    if "v7" in kind:                      # v7x: 2 TCs/chip, 64 MiB VMEM per TC
        num_tc = 2
        vmem_cap = min(vmem_cap, 64 * 1024 * 1024)
    return vmem_cap, num_tc


def _choose_tile_rows(rows_needed, num_streams, dtype_bytes, tile_budget_bytes,
                      cap=8192):
    """Largest row tile (multiple of 8) whose double-buffered input streams plus
    elementwise f32 intermediates fit the VMEM tile budget."""
    per_row = 2 * num_streams * _LANES * dtype_bytes + 2 * _LANES * 4
    tile_rows = (tile_budget_bytes // per_row // _SUBLANES) * _SUBLANES
    tile_rows = min(tile_rows, cap, _round_up(max(rows_needed, 1), _SUBLANES))
    return max(tile_rows, _SUBLANES)


def _make_kernel(num_args, numel, tile_rows):
    inv_numel = 1.0 / float(numel)
    n_slabs = tile_rows // _SUBLANES

    def kernel(*refs):
        pred_refs = refs[:num_args]
        target_ref = refs[num_args]
        out_ref = refs[num_args + 1]      # (8, 128) per-split scaled partial
        acc_ref = refs[num_args + 2]      # (8, 128) f32 running accumulator

        k = pl.program_id(1)              # reduction over row tiles
        last_k = pl.num_programs(1) - 1

        @pl.when(k == 0)
        def _init():
            acc_ref[...] = jnp.zeros_like(acc_ref)

        # Hot loop: load the target tile once, reuse it for all predictions.
        tgt = target_ref[...].astype(jnp.float32)
        acc = acc_ref[...]
        for p_ref in pred_refs:
            d = p_ref[...].astype(jnp.float32) - tgt
            sq = d * d
            # Rows grouped 8-at-a-time keep each (8,128) vreg intact (no
            # cross-tile relayout); the axis-0 reduce is pure VPU vreg adds.
            acc = acc + jnp.sum(sq.reshape(n_slabs, _SUBLANES, _LANES), axis=0)
        acc_ref[...] = acc

        # Finalize once per split: scale partial SSE -> partial sum of MSEs.
        @pl.when(k == last_k)
        def _finalize():
            out_ref[...] = acc_ref[...] * jnp.float32(inv_numel)

    return kernel


def iterative_loss(args, target, mu, logvar, beta=1.0):
    """args: list of predictions, each with the same shape as `target`."""
    num_args = len(args)
    assert num_args >= 1

    numel = int(target.size)
    dtype_bytes = max([jnp.dtype(a.dtype).itemsize for a in args]
                      + [jnp.dtype(target.dtype).itemsize])
    num_streams = num_args + 1            # predictions + target

    # Generation-aware VMEM budgeting (v7x: 64 MiB/TC; v5e/v6e: 128 MiB).
    vmem_cap, num_tc = _tpu_info()
    vmem_limit = min(int(0.75 * vmem_cap), 96 * 1024 * 1024)
    tile_budget = int(0.6 * vmem_limit)   # headroom for intermediates / scratch

    # Leading split axis = number of TensorCores (1 on v5e/v6e, 2 on v7x).
    nsplit = num_tc
    rows_raw = _cdiv(numel, _LANES)
    rows_per_split = _cdiv(rows_raw, nsplit)

    tile_rows = _choose_tile_rows(rows_per_split, num_streams, dtype_bytes,
                                  tile_budget)
    tiles_per_split = _cdiv(rows_per_split, tile_rows)
    rows_padded = nsplit * tiles_per_split * tile_rows
    numel_padded = rows_padded * _LANES

    # Lane-dense (rows, 128) slabs; reshape of a contiguous array is free and
    # identical zero padding of preds and target contributes 0 to the SSE.
    def to_slab(a):
        flat = a.reshape(-1)
        if numel_padded != numel:
            flat = jnp.pad(flat, (0, numel_padded - numel))
        return flat.reshape(rows_padded, _LANES)

    preds2d = [to_slab(a) for a in args]
    tgt2d = to_slab(target)

    kernel = _make_kernel(num_args, numel, tile_rows)

    tile_spec = pl.BlockSpec((tile_rows, _LANES),
                             lambda s, k: (s * tiles_per_split + k, 0))
    in_specs = [tile_spec] * num_streams
    out_spec = pl.BlockSpec((None, _SUBLANES, _LANES), lambda s, k: (s, 0, 0))

    if nsplit > 1:
        # Only CORE_PARALLEL actually shards the grid across the two v7x TCs.
        dim_sem = (pltpu.CORE_PARALLEL, pltpu.ARBITRARY)
    else:
        dim_sem = (pltpu.ARBITRARY, pltpu.ARBITRARY)

    partials = pl.pallas_call(
        kernel,
        out_shape=jax.ShapeDtypeStruct((nsplit, _SUBLANES, _LANES), jnp.float32),
        grid_spec=pltpu.PrefetchScalarGridSpec(
            num_scalar_prefetch=0,
            grid=(nsplit, tiles_per_split),
            in_specs=in_specs,
            out_specs=out_spec,
            scratch_shapes=[pltpu.VMEM((_SUBLANES, _LANES), jnp.float32)],
        ),
        compiler_params=pltpu.CompilerParams(
            dimension_semantics=dim_sem,
            vmem_limit_bytes=int(vmem_limit),
        ),
    )(*preds2d, tgt2d)

    # Tiny glue: cross-lane / cross-split sum of the per-arg MSEs, plus the
    # O(B*Z) KL term in plain JAX (negligible; XLA fuses it with the sum).
    sum_mse = jnp.sum(partials)
    mu32 = mu.astype(jnp.float32)
    lv32 = logvar.astype(jnp.float32)
    kld = -0.5 * jnp.sum(1.0 + lv32 - mu32 * mu32 - jnp.exp(lv32))
    kld = kld / jnp.float32(target.shape[0])
    return (sum_mse + jnp.float32(beta) * kld) / jnp.float32(num_args)


def _reference_loss(args, target, mu, logvar, beta=1.0):
    """Pure-JAX reference matching the PyTorch semantics above."""
    losses = []
    pred = args[0]
    mse0 = jnp.mean((pred.astype(jnp.float32) - target.astype(jnp.float32)) ** 2)
    kl = -0.5 * jnp.sum(1.0 + logvar - mu * mu - jnp.exp(logvar)) / target.shape[0]
    losses.append(mse0 + beta * kl)
    for a in args[1:]:
        losses.append(jnp.mean((a.astype(jnp.float32) - target.astype(jnp.float32)) ** 2))
    return sum(losses) / len(losses)


if __name__ == "__main__":
    key = jax.random.PRNGKey(0)
    B, C, H, W = 2, 4, 16, 16
    Z = 32  # latent dim
    beta = 1.0

    k1, k2, k3, k4, k5, k6 = jax.random.split(key, 6)
    pred = jax.random.uniform(k1, (B, C, H, W), dtype=jnp.float32)
    extra1 = jax.random.uniform(k2, (B, C, H, W), dtype=jnp.float32)
    extra2 = jax.random.uniform(k3, (B, C, H, W), dtype=jnp.float32)
    target = jax.random.uniform(k4, (B, C, H, W), dtype=jnp.float32)
    mu = jax.random.normal(k5, (B, Z), dtype=jnp.float32)
    logvar = 0.1 * jax.random.normal(k6, (B, Z), dtype=jnp.float32)

    args = [pred, extra1, extra2]

    loss = iterative_loss(args, target, mu, logvar, beta=beta)
    loss = jax.block_until_ready(loss)

    ref = _reference_loss(args, target, mu, logvar, beta=beta)
    assert jnp.allclose(loss, ref, rtol=1e-5, atol=1e-5), (loss, ref)

    print("KERNEL_OK")
</pallas_src>

<mosaic_0001>
module attributes {stable_mosaic.version = 11 : i64} {
  func.func @kernel(%arg0: i32, %arg1: i32, %arg2: memref<16x128xf32, #tpu.memory_space<vmem>>, %arg3: memref<16x128xf32, #tpu.memory_space<vmem>>, %arg4: memref<16x128xf32, #tpu.memory_space<vmem>>, %arg5: memref<16x128xf32, #tpu.memory_space<vmem>>, %arg6: memref<1x8x128xf32, #tpu.memory_space<vmem>>, %arg7: memref<8x128xf32, #tpu.memory_space<vmem>>) attributes {dimension_semantics = [#tpu.dimension_semantics<arbitrary>, #tpu.dimension_semantics<arbitrary>], iteration_bounds = array<i64: 1, 1>, scalar_prefetch = 0 : i64, scratch_operands = 1 : i64, tpu.core_type = #tpu.core_type<tc>, window_params = [{transform_indices = @transform_0, window_bounds = array<i64: 16, 128>}, {transform_indices = @transform_1, window_bounds = array<i64: 16, 128>}, {transform_indices = @transform_2, window_bounds = array<i64: 16, 128>}, {transform_indices = @transform_3, window_bounds = array<i64: 16, 128>}, {transform_indices = @transform_4, window_bounds = array<i64: 1, 8, 128>}]} {
    %c0_i32 = arith.constant 0 : i32
    %0 = arith.cmpi eq, %arg1, %c0_i32 : i32
    %1 = arith.extui %0 : i1 to i32
    %c0_i32_0 = arith.constant 0 : i32
    %2 = arith.cmpi ne, %1, %c0_i32_0 : i32
    scf.if %2 {
      %cst_16 = arith.constant 0.000000e+00 : f32
      %27 = vector.broadcast %cst_16 : f32 to vector<8x128xf32>
      %c0_17 = arith.constant 0 : index
      %c0_18 = arith.constant 0 : index
      %28 = vector.load %arg7[%c0_17, %c0_18] : memref<8x128xf32, #tpu.memory_space<vmem>>, vector<8x128xf32>
      tpu.vector_store %arg7[%c0_17, %c0_18], %27 {strides = array<i32>} : memref<8x128xf32, #tpu.memory_space<vmem>>, vector<8x128xf32>,
    } else {
    }
    %c0 = arith.constant 0 : index
    %c0_1 = arith.constant 0 : index
    %3 = vector.load %arg5[%c0, %c0_1] : memref<16x128xf32, #tpu.memory_space<vmem>>, vector<16x128xf32>
    %c0_2 = arith.constant 0 : index
    %c0_3 = arith.constant 0 : index
    %4 = vector.load %arg7[%c0_2, %c0_3] : memref<8x128xf32, #tpu.memory_space<vmem>>, vector<8x128xf32>
    %c0_4 = arith.constant 0 : index
    %c0_5 = arith.constant 0 : index
    %5 = vector.load %arg2[%c0_4, %c0_5] : memref<16x128xf32, #tpu.memory_space<vmem>>, vector<16x128xf32>
    %6 = arith.subf %5, %3 : vector<16x128xf32>
    %7 = arith.mulf %6, %6 : vector<16x128xf32>
    %8 = vector.shape_cast %7 : vector<16x128xf32> to vector<2x8x128xf32>
    %cst = arith.constant dense<0.000000e+00> : vector<8x128xf32>
    %9 = vector.multi_reduction <add>, %8, %cst [0] : vector<2x8x128xf32> to vector<8x128xf32>
    %10 = arith.addf %4, %9 : vector<8x128xf32>
    %c0_6 = arith.constant 0 : index
    %c0_7 = arith.constant 0 : index
    %11 = vector.load %arg3[%c0_6, %c0_7] : memref<16x128xf32, #tpu.memory_space<vmem>>, vector<16x128xf32>
    %12 = arith.subf %11, %3 : vector<16x128xf32>
    %13 = arith.mulf %12, %12 : vector<16x128xf32>
    %14 = vector.shape_cast %13 : vector<16x128xf32> to vector<2x8x128xf32>
    %cst_8 = arith.constant dense<0.000000e+00> : vector<8x128xf32>
    %15 = vector.multi_reduction <add>, %14, %cst_8 [0] : vector<2x8x128xf32> to vector<8x128xf32>
    %16 = arith.addf %10, %15 : vector<8x128xf32>
    %c0_9 = arith.constant 0 : index
    %c0_10 = arith.constant 0 : index
    %17 = vector.load %arg4[%c0_9, %c0_10] : memref<16x128xf32, #tpu.memory_space<vmem>>, vector<16x128xf32>
    %18 = arith.subf %17, %3 : vector<16x128xf32>
    %19 = arith.mulf %18, %18 : vector<16x128xf32>
    %20 = vector.shape_cast %19 : vector<16x128xf32> to vector<2x8x128xf32>
    %cst_11 = arith.constant dense<0.000000e+00> : vector<8x128xf32>
    %21 = vector.multi_reduction <add>, %20, %cst_11 [0] : vector<2x8x128xf32> to vector<8x128xf32>
    %22 = arith.addf %16, %21 : vector<8x128xf32>
    %c0_12 = arith.constant 0 : index
    %c0_13 = arith.constant 0 : index
    %23 = vector.load %arg7[%c0_12, %c0_13] : memref<8x128xf32, #tpu.memory_space<vmem>>, vector<8x128xf32>
    tpu.vector_store %arg7[%c0_12, %c0_13], %22 {strides = array<i32>} : memref<8x128xf32, #tpu.memory_space<vmem>>, vector<8x128xf32>,
    %c0_i32_14 = arith.constant 0 : i32
    %24 = arith.cmpi eq, %arg1, %c0_i32_14 : i32
    %25 = arith.extui %24 : i1 to i32
    %c0_i32_15 = arith.constant 0 : i32
    %26 = arith.cmpi ne, %25, %c0_i32_15 : i32
    scf.if %26 {
      %c0_16 = arith.constant 0 : index
      %c0_17 = arith.constant 0 : index
      %27 = vector.load %arg7[%c0_16, %c0_17] : memref<8x128xf32, #tpu.memory_space<vmem>>, vector<8x128xf32>
      %cst_18 = arith.constant 4.8828125E-4 : f32
      %28 = vector.broadcast %cst_18 : f32 to vector<8x128xf32>
      %29 = arith.mulf %27, %28 : vector<8x128xf32>
      %c0_19 = arith.constant 0 : index
      %c0_20 = arith.constant 0 : index
      %c0_21 = arith.constant 0 : index
      %30 = vector.load %arg6[%c0_19, %c0_20, %c0_21] : memref<1x8x128xf32, #tpu.memory_space<vmem>>, vector<1x8x128xf32>
      %31 = vector.shape_cast %30 : vector<1x8x128xf32> to vector<8x128xf32>
      %32 = vector.shape_cast %29 : vector<8x128xf32> to vector<1x8x128xf32>
      tpu.vector_store %arg6[%c0_19, %c0_20, %c0_21], %32 {strides = array<i32>} : memref<1x8x128xf32, #tpu.memory_space<vmem>>, vector<1x8x128xf32>,
    } else {
    }
    return
  }
  func.func @transform_0(%arg0: i32, %arg1: i32) -> (i32, i32) {
    %c1_i32 = arith.constant 1 : i32
    %0 = arith.muli %arg0, %c1_i32 : i32
    %1 = arith.addi %0, %arg1 : i32
    %c0_i32 = arith.constant 0 : i32
    %c0_i32_0 = arith.constant 0 : i32
    return %1, %c0_i32 : i32, i32
  }
  func.func @transform_1(%arg0: i32, %arg1: i32) -> (i32, i32) {
    %c1_i32 = arith.constant 1 : i32
    %0 = arith.muli %arg0, %c1_i32 : i32
    %1 = arith.addi %0, %arg1 : i32
    %c0_i32 = arith.constant 0 : i32
    %c0_i32_0 = arith.constant 0 : i32
    return %1, %c0_i32 : i32, i32
  }
  func.func @transform_2(%arg0: i32, %arg1: i32) -> (i32, i32) {
    %c1_i32 = arith.constant 1 : i32
    %0 = arith.muli %arg0, %c1_i32 : i32
    %1 = arith.addi %0, %arg1 : i32
    %c0_i32 = arith.constant 0 : i32
    %c0_i32_0 = arith.constant 0 : i32
    return %1, %c0_i32 : i32, i32
  }
  func.func @transform_3(%arg0: i32, %arg1: i32) -> (i32, i32) {
    %c1_i32 = arith.constant 1 : i32
    %0 = arith.muli %arg0, %c1_i32 : i32
    %1 = arith.addi %0, %arg1 : i32
    %c0_i32 = arith.constant 0 : i32
    %c0_i32_0 = arith.constant 0 : i32
    return %1, %c0_i32 : i32, i32
  }
  func.func @transform_4(%arg0: i32, %arg1: i32) -> (i32, i32, i32) {
    %c0_i32 = arith.constant 0 : i32
    %c0_i32_0 = arith.constant 0 : i32
    %c0_i32_1 = arith.constant 0 : i32
    return %arg0, %c0_i32, %c0_i32_0 : i32, i32, i32
  }
}

</mosaic_0001>

<llo_original>
// kernel: tpu_custom_call.1
$region0: #{tpu_custom_call.1}
  #allocation0 [shape = 'u32[]', space=smem, size = 0x4, offset = 0x4, fixed_abs, tag = 'smem constant byte address 0x4 - core index']
  #allocation1 [shape = 'u32[144,128]{1,0:T(1,128)}', space=vmem, size = 0x12000, scoped, tag = 'internal scratch']
  #allocation2 [shape = 'f32[8,128]{1,0:T(8,128)}', space=vmem, size = 0x1000, scoped, tag = 'scratch operand']
  %s0 = inlined_call_operand.hbm [shape: f32[16,128], index: 0, kind: input, shape index: {}]
  %s1 = inlined_call_operand.hbm [shape: f32[16,128], index: 1, kind: input, shape index: {}]
  %s2 = inlined_call_operand.hbm [shape: f32[16,128], index: 2, kind: input, shape index: {}]
  %s3 = inlined_call_operand.hbm [shape: f32[16,128], index: 3, kind: input, shape index: {}]
  %s4 = inlined_call_operand.hbm [shape: f32[1,8,128], index: 4, kind: output, shape index: {}]
  %s5 = sld [smem:[#allocation0]]
  $region50: #{tpu_custom_call.1} parent=0
    _
  %s7 = ssub.s32 1, %s5
  %s8 = scalar_select 0, %s7, %s5
  $region1: #{tpu_custom_call.1} parent=0
    #allocation3 [shape = 'u8[8192]{0}', space=vmem, size = 0x2000, scoped, tag = 'input window, operand 0, single buffered']
    #allocation4 [shape = 's32[1]{0}', space=sflag, size = 0x4, scoped, tag = 'scoped memory for tpu_custom_call.1']
    #allocation5 [shape = 's32[1]{0}', space=sflag, size = 0x4, scoped, tag = 'scoped memory for tpu_custom_call.1']
    #allocation6 [shape = 'u8[8192]{0}', space=vmem, size = 0x2000, scoped, tag = 'input window, operand 1, single buffered']
    #allocation7 [shape = 's32[1]{0}', space=sflag, size = 0x4, scoped, tag = 'scoped memory for tpu_custom_call.1']
    #allocation8 [shape = 'u8[8192]{0}', space=vmem, size = 0x2000, scoped, tag = 'input window, operand 2, single buffered']
    #allocation9 [shape = 'u8[8192]{0}', space=vmem, size = 0x2000, scoped, tag = 'input window, operand 3, single buffered']
    #allocation10 [shape = 's32[1]{0}', space=sflag, size = 0x4, scoped, tag = 'scoped memory for tpu_custom_call.1']
    #allocation11 [shape = 'u8[4096]{0}', space=vmem, size = 0x1000, scoped, tag = 'output window, operand 0, single buffered']
    %9 = vsyncpa [#allocation4], 0
    %10 = vsyncpa [#allocation7], 0
    %11 = vsyncpa [#allocation10], 0
    %12 = vsyncpa [#allocation5], 0
    // Predicated region
    $region2: #{tpu_custom_call.1} parent=1 // pred_check
      _
    $region3: #{tpu_custom_call.1} parent=1 // pred_check_branch
      %14 = sbr.rel (0) target = $region5
    $region4: #{tpu_custom_call.1} parent=1 // pred_region
      %s15 = sadd.s32 0, 0
      %s16 = smul.u32 2, %s15
      %s18 = ssub.s32 256, 256
      %19 = vsyncadd [#allocation4], %s18
      %s20 = smul.addr %s16, 128
      %s21 = scalar_lea.hbm %s0, %s20
      %s22 = sshll.u32 [#allocation3], 4
      %s23 = int_to_ptr.vmem [resolvable:$true] %s22
      %28 = dma.hbm_to_vmem [thread:$0]  %s21, 256, %s23, [#allocation4], 128, 128, 8
    $region5: #{tpu_custom_call.1} parent=1 // pred_fallthru
      _
    // Predicated region
    $region6: #{tpu_custom_call.1} parent=1 // pred_check
      _
    $region7: #{tpu_custom_call.1} parent=1 // pred_check_branch
      %30 = sbr.rel (0) target = $region9
    $region8: #{tpu_custom_call.1} parent=1 // pred_region
      %s31 = sadd.s32 0, 0
      %s32 = smul.u32 2, %s31
      %s34 = ssub.s32 256, 256
      %35 = vsyncadd [#allocation7], %s34
      %s36 = smul.addr %s32, 128
      %s37 = scalar_lea.hbm %s1, %s36
      %s38 = sshll.u32 [#allocation6], 4
      %s39 = int_to_ptr.vmem [resolvable:$true] %s38
      %44 = dma.hbm_to_vmem [thread:$0]  %s37, 256, %s39, [#allocation7], 128, 128, 8
    $region9: #{tpu_custom_call.1} parent=1 // pred_fallthru
      _
    // Predicated region
    $region10: #{tpu_custom_call.1} parent=1 // pred_check
      _
    $region11: #{tpu_custom_call.1} parent=1 // pred_check_branch
      %46 = sbr.rel (0) target = $region13
    $region12: #{tpu_custom_call.1} parent=1 // pred_region
      %s47 = sadd.s32 0, 0
      %s48 = smul.u32 2, %s47
      %s50 = ssub.s32 256, 256
      %51 = vsyncadd [#allocation7], %s50
      %s52 = smul.addr %s48, 128
      %s53 = scalar_lea.hbm %s2, %s52
      %s54 = sshll.u32 [#allocation8], 4
      %s55 = int_to_ptr.vmem [resolvable:$true] %s54
      %60 = dma.hbm_to_vmem [thread:$0]  %s53, 256, %s55, [#allocation7], 128, 128, 8
    $region13: #{tpu_custom_call.1} parent=1 // pred_fallthru
      _
    // Predicated region
    $region14: #{tpu_custom_call.1} parent=1 // pred_check
      _
    $region15: #{tpu_custom_call.1} parent=1 // pred_check_branch
      %62 = sbr.rel (0) target = $region17
    $region16: #{tpu_custom_call.1} parent=1 // pred_region
      %s63 = sadd.s32 0, 0
      %s64 = smul.u32 2, %s63
      %s66 = ssub.s32 256, 256
      %67 = vsyncadd [#allocation10], %s66
      %s68 = smul.addr %s64, 128
      %s69 = scalar_lea.hbm %s3, %s68
      %s70 = sshll.u32 [#allocation9], 4
      %s71 = int_to_ptr.vmem [resolvable:$true] %s70
      %76 = dma.hbm_to_vmem [thread:$0]  %s69, 256, %s71, [#allocation10], 128, 128, 8
    $region17: #{tpu_custom_call.1} parent=1 // pred_fallthru
      _
    // Predicated region
    $region18: #{tpu_custom_call.1} parent=1 // pred_check
      _
    $region19: #{tpu_custom_call.1} parent=1 // pred_check_branch
      %78 = sbr.rel (0) target = $region21
    $region20: #{tpu_custom_call.1} parent=1 // pred_region
      %79 = dma.done [#allocation4], 256
    $region21: #{tpu_custom_call.1} parent=1 // pred_fallthru
      _
    // Predicated region
    $region22: #{tpu_custom_call.1} parent=1 // pred_check
      _
    $region23: #{tpu_custom_call.1} parent=1 // pred_check_branch
      %81 = sbr.rel (0) target = $region25
    $region24: #{tpu_custom_call.1} parent=1 // pred_region
      %82 = dma.done [#allocation7], 256
    $region25: #{tpu_custom_call.1} parent=1 // pred_fallthru
      _
    // Predicated region
    $region26: #{tpu_custom_call.1} parent=1 // pred_check
      _
    $region27: #{tpu_custom_call.1} parent=1 // pred_check_branch
      %84 = sbr.rel (0) target = $region29
    $region28: #{tpu_custom_call.1} parent=1 // pred_region
      %85 = dma.done [#allocation7], 256
    $region29: #{tpu_custom_call.1} parent=1 // pred_fallthru
      _
    // Predicated region
    $region30: #{tpu_custom_call.1} parent=1 // pred_check
      _
    $region31: #{tpu_custom_call.1} parent=1 // pred_check_branch
      %87 = sbr.rel (0) target = $region33
    $region32: #{tpu_custom_call.1} parent=1 // pred_region
      %88 = dma.done [#allocation10], 256
    $region33: #{tpu_custom_call.1} parent=1 // pred_fallthru
      _
    %s89 = sadd.s32 0, 0
    %s90 = smul.u32 2, %s89
    %s91 = sadd.s32 0, 0
    %s92 = smul.u32 2, %s91
    %s93 = sadd.s32 0, 0
    %s94 = smul.u32 2, %s93
    %s95 = sadd.s32 0, 0
    %s96 = smul.u32 2, %s95
    %p97 = scmp.eq.s32.totalorder 0, 0
    // Predicated region
    $region34: #{tpu_custom_call.1} parent=1 // pred_check
      %p98 = pneg %p97
    $region35: #{tpu_custom_call.1} parent=1 // pred_check_branch
      %100 = sbr.rel (%p98) target = $region37
    $region36: #{tpu_custom_call.1} parent=1 // pred_region
      %101 = vst [vmem:[#allocation2] sm:$0xff] 0.0
    $region37: #{tpu_custom_call.1} parent=1 // pred_fallthru
      _
    %v102 = vld [vmem:[#allocation9] sm:$0xff]
    %v103 = vld [vmem:[#allocation9 + $0x8] sm:$0xff]
    %v104 = vld [vmem:[#allocation2] sm:$0xff]
    %v105 = vld [vmem:[#allocation3] sm:$0xff]
    %v106 = vld [vmem:[#allocation3 + $0x8] sm:$0xff]
    %v107 = vsub.f32 %v105, %v102
    %v108 = vsub.f32 %v106, %v103
    %v109 = vmul.f32 %v107, %v107
    %v110 = vmul.f32 %v108, %v108
    %v111 = vadd.f32 %v109, %v110
    %v112 = vadd.f32 %v104, %v111
    %v113 = vld [vmem:[#allocation6] sm:$0xff]
    %v114 = vld [vmem:[#allocation6 + $0x8] sm:$0xff]
    %v115 = vsub.f32 %v113, %v102
    %v116 = vsub.f32 %v114, %v103
    %v117 = vmul.f32 %v115, %v115
    %v118 = vmul.f32 %v116, %v116
    %v119 = vadd.f32 %v117, %v118
    %v120 = vadd.f32 %v112, %v119
    %v121 = vld [vmem:[#allocation8] sm:$0xff]
    %v122 = vld [vmem:[#allocation8 + $0x8] sm:$0xff]
    %v123 = vsub.f32 %v121, %v102
    %v124 = vsub.f32 %v122, %v103
    %v125 = vmul.f32 %v123, %v123
    %v126 = vmul.f32 %v124, %v124
    %v127 = vadd.f32 %v125, %v126
    %v128 = vadd.f32 %v120, %v127
    %129 = vst [vmem:[#allocation2] sm:$0xff] %v128
    // Predicated region
    $region38: #{tpu_custom_call.1} parent=1 // pred_check
      %p130 = pneg %p97
    $region39: #{tpu_custom_call.1} parent=1 // pred_check_branch
      %132 = sbr.rel (%p130) target = $region41
    $region40: #{tpu_custom_call.1} parent=1 // pred_region
      %v133 = vld [vmem:[#allocation2] sm:$0xff]
      %v134 = vmul.f32 %v133, 0.00048828125
      %135 = vst [vmem:[#allocation11] sm:$0xff] %v134
    $region41: #{tpu_custom_call.1} parent=1 // pred_fallthru
      _
    // Predicated region
    $region42: #{tpu_custom_call.1} parent=1 // pred_check
      _
    $region43: #{tpu_custom_call.1} parent=1 // pred_check_branch
      %137 = sbr.rel (0) target = $region45
    $region44: #{tpu_custom_call.1} parent=1 // pred_region
      %s139 = ssub.s32 128, 128
      %140 = vsyncadd [#allocation5], %s139
      %s142 = sshll.u32 [#allocation11], 4
      %s143 = int_to_ptr.vmem [resolvable:$true] %s142
      %145 = dma.vmem_to_hbm [thread:$0]  %s143, 128, %s4, [#allocation5]
    $region45: #{tpu_custom_call.1} parent=1 // pred_fallthru
      _
    // Predicated region
    $region46: #{tpu_custom_call.1} parent=1 // pred_check
      _
    $region47: #{tpu_custom_call.1} parent=1 // pred_check_branch
      %147 = sbr.rel (0) target = $region49
    $region48: #{tpu_custom_call.1} parent=1 // pred_region
      %148 = dma.done [#allocation5], 128
    $region49: #{tpu_custom_call.1} parent=1 // pred_fallthru
      _
    %149 = vsyncpa [#allocation4], 1
    %150 = vsyncpa [#allocation7], 1
    %151 = vsyncpa [#allocation10], 1
    %152 = vsyncpa [#allocation5], 1

</llo_original>
